<compile_context>
chip_gen: v5e
topology: v5e:2x2
jax: 0.10.0
libtpu: 0.0.40
codegen_flags: <defaults>
</compile_context>

<pallas_src>
import functools

import jax
import jax.numpy as jnp
from jax import lax
from jax.experimental import pallas as pl
from jax.experimental.pallas import tpu as pltpu


# --------------------------------------------------------------------------------------
# Roll-convention probe (resolved once, cached).
# --------------------------------------------------------------------------------------
@functools.cache
def _roll_matches_np_roll() -> bool:
    """True if pltpu.roll(x, shift=+1) behaves like np.roll (last element wraps to 0)."""
    def k(x_ref, o_ref):
        o_ref[...] = pltpu.roll(x_ref[...], shift=1, axis=1)

    x = jnp.tile(jnp.arange(128, dtype=jnp.float32)[None, :], (8, 1))
    y = pl.pallas_call(k, out_shape=jax.ShapeDtypeStruct((8, 128), jnp.float32))(x)
    return bool(y[0, 0] == jnp.float32(127.0))


# --------------------------------------------------------------------------------------
# Kernel
# --------------------------------------------------------------------------------------
def make_mbconv_kernel(BB, H, W, cexp, KH, KW, skip, roll_fwd):
    """Kernel factory closing over the static block configuration."""
    PH, PW = KH // 2, KW // 2
    WCexp = W * cexp

    def _shift(v, offset, axis, size):
        # rolled[i] == v[i - offset] along `axis`, independent of pltpu.roll convention.
        amt = (offset if roll_fwd else -offset) % size
        return pltpu.roll(v, shift=amt, axis=axis)

    def kernel(x_ref, w_exp_ref, bn0_b_ref, taps_ref, bn1_b_ref,
               w_sr_ref, b_sr_ref, w_se_ref, b_se_ref,
               w_proj_ref, bn2_b_ref, out_ref):
        WCin = x_ref.shape[-1]
        WCout = out_ref.shape[-1]
        x2 = x_ref[...].reshape(BB * H, WCin)                     # f32, kept for id_skip

        # ---- 1x1 expand: one (BB*H, W*Cin) x (W*Cin, W*Cexp) block-diag matmul ------
        xe = jnp.dot(x2.astype(jnp.bfloat16), w_exp_ref[...],
                     preferred_element_type=jnp.float32) + bn0_b_ref[...]
        xe = xe * jax.nn.sigmoid(xe)                              # swish

        gated = []
        for b in range(BB):                                       # static unroll over images
            xe_b = xe[b * H:(b + 1) * H, :]                       # (H, W*Cexp)

            # ---- depthwise KxK, stride 1, SAME: shift-and-accumulate ----------------
            # Edge masks + BN1 scale + W tiling are folded into taps (pre-broadcast
            # over H): each tap is one XLU roll + one VPU mul-add, kh-outer so the H
            # roll is done once per row of taps.
            acc = jnp.zeros((H, WCexp), jnp.float32)
            for kh in range(KH):
                sh = PH - kh
                th = xe_b if sh == 0 else _shift(xe_b, sh, 0, H)
                for kw in range(KW):
                    sw = PW - kw
                    t = th if sw == 0 else _shift(th, sw * cexp, 1, WCexp)
                    acc = acc + t * taps_ref[kh * KW + kw]
            xd = acc + bn1_b_ref[...]
            xd = xd * jax.nn.sigmoid(xd)                          # swish

            # ---- Squeeze-Excitation, lane-dense (no M=1 MXU passes) -----------------
            rowsum = jnp.sum(xd, axis=0, keepdims=True)           # (1, W*Cexp)
            sq = jnp.sum(rowsum * w_sr_ref[...], axis=-1,
                         keepdims=True) + b_sr_ref[...]           # (Csq, 1); 1/(H*W) folded
            sq = sq * jax.nn.sigmoid(sq)                          # swish
            ex = jnp.sum(sq * w_se_ref[...], axis=0,
                         keepdims=True) + b_se_ref[...]           # (1, W*Cexp), W-tiled
            gated.append(xd * jax.nn.sigmoid(ex))                 # SE gate (bcast over rows)

        xg = gated[0] if BB == 1 else jnp.concatenate(gated, axis=0)   # (BB*H, W*Cexp)

        # ---- 1x1 project (block-diag, BN2 scale folded) + bias + identity skip ------
        xo = jnp.dot(xg.astype(jnp.bfloat16), w_proj_ref[...],
                     preferred_element_type=jnp.float32) + bn2_b_ref[...]
        if skip:
            xo = xo + x2                                          # id_skip (stride 1, Cin==Cout)
        # TODO(synk): drop_connect is training-only; the inference path is identity.
        out_ref[...] = xo.reshape(BB, H, WCout).astype(out_ref.dtype)

    return kernel


# --------------------------------------------------------------------------------------
# Parameter preparation (plain JAX, done once per set of weights)
# --------------------------------------------------------------------------------------
def fold_bn(gamma, beta, mean, var, eps):
    scale = gamma / jnp.sqrt(var + eps)
    return scale, beta - mean * scale


def prepare_params(raw, H, W):
    """Fold eval-mode BN scales, SAME-padding edge masks and the spatial-mean factor into
    the weights and build the lane-dense (W-block-diagonal / W-tiled) operands."""
    cin, cexp = raw["w_exp"].shape
    KH, KW, _ = raw["w_dw"].shape
    csq = raw["w_sr"].shape[1]
    PH, PW = KH // 2, KW // 2

    s0, b0 = fold_bn(*raw["bn0"])
    s1, b1 = fold_bn(*raw["bn1"])
    s2, b2 = fold_bn(*raw["bn2"])

    eye = jnp.eye(W, dtype=jnp.float32)
    tile_w = lambda v: jnp.tile(v.reshape(1, -1), (1, W))         # per-channel -> (1, W*C)

    # Depthwise taps: BN1 scale, W tiling and the per-tap SAME-padding edge masks all
    # folded in; pre-broadcast over H so the kernel never masks or sublane-broadcasts.
    dwt = (raw["w_dw"] * s1[None, None, :]).reshape(KH * KW, cexp)
    taps_flat = jnp.tile(dwt, (1, W))                             # (KH*KW, W*cexp)
    hpos = jnp.arange(H)
    wpos = jnp.arange(W * cexp) // cexp
    taps = []
    for kh in range(KH):
        sh = PH - kh                                              # dest row h reads source h-sh
        hm = ((hpos - sh >= 0) & (hpos - sh < H)).astype(jnp.float32)      # (H,)
        for kw in range(KW):
            sw = PW - kw
            wm = ((wpos - sw >= 0) & (wpos - sw < W)).astype(jnp.float32)  # (W*cexp,)
            taps.append(hm[:, None] * (wm * taps_flat[kh * KW + kw])[None, :])
    taps = jnp.stack(taps, axis=0)                                # (KH*KW, H, W*cexp)

    return dict(
        w_exp=jnp.kron(eye, raw["w_exp"] * s0[None, :]).astype(jnp.bfloat16),
        bn0_b=tile_w(b0),
        taps=taps,
        bn1_b=tile_w(b1),
        # SE operands, lane-dense: (Csq, W*cexp) rows instead of a lane-padded
        # (W*cexp, Csq) buffer; pooling 1/(H*W) folded into w_sr.
        w_sr=jnp.tile(raw["w_sr"].T / float(H * W), (1, W)),      # (csq, W*cexp)
        b_sr=raw["b_sr"].reshape(csq, 1),
        w_se=jnp.tile(raw["w_se"], (1, W)),                       # (csq, W*cexp)
        b_se=tile_w(raw["b_se"]),
        w_proj=jnp.kron(eye, raw["w_proj"] * s2[None, :]).astype(jnp.bfloat16),
        bn2_b=tile_w(b2),
    )


# --------------------------------------------------------------------------------------
# pallas_call wrappers
# --------------------------------------------------------------------------------------
def _pick_block_batch(B, H):
    """Largest BB dividing B with BB*H <= 128 (full MXU rows), but keep at least two grid
    steps when B >= 2 so ("parallel",) can still shard across v7x's two TensorCores."""
    bb = 1
    for cand in range(1, B + 1):
        if B % cand:
            continue
        if cand * H > 128:
            break
        if B == 1 or B // cand >= 2:
            bb = cand
    return bb


def mbconv_block_packed(x_packed, kp, *, cin, cexp, cout, KH, KW,
                        id_skip=True, donate_input=False):
    """x_packed: (B, H, W*cin) f32, channels packed into lanes. Returns (B, H, W*cout).
    Chain blocks in this packed layout to avoid per-block HBM transposes.
    donate_input=True aliases the input buffer into the output (cin==cout only); set it
    only when the caller owns x_packed exclusively."""
    B, H, WCin = x_packed.shape
    W = WCin // cin
    BB = _pick_block_batch(B, H)
    skip = id_skip and cin == cout
    kernel = make_mbconv_kernel(BB, H, W, cexp, KH, KW, skip, _roll_matches_np_roll())

    def const_spec(a):                                            # constant block -> DMA'd once
        return pl.BlockSpec(a.shape, lambda b, nd=a.ndim: (0,) * nd)

    args = (x_packed, kp["w_exp"], kp["bn0_b"], kp["taps"], kp["bn1_b"],
            kp["w_sr"], kp["b_sr"], kp["w_se"], kp["b_se"],
            kp["w_proj"], kp["bn2_b"])
    in_specs = [pl.BlockSpec((BB, H, WCin), lambda b: (b, 0, 0))]
    in_specs += [const_spec(a) for a in args[1:]]

    aliases = {0: 0} if (donate_input and cin == cout) else {}
    return pl.pallas_call(
        kernel,
        grid=(B // BB,),
        out_shape=jax.ShapeDtypeStruct((B, H, W * cout), jnp.float32),
        in_specs=in_specs,
        out_specs=pl.BlockSpec((BB, H, W * cout), lambda b: (b, 0, 0)),
        input_output_aliases=aliases,
        compiler_params=pltpu.CompilerParams(
            dimension_semantics=("parallel",),
        ),
    )(*args)


def mbconv_block(x_nchw, kp, *, cexp, cout, KH, KW):
    """NCHW in/out to match the PyTorch module. For chains of blocks, stay in the packed
    (B, H, W*C) layout and call mbconv_block_packed directly."""
    B, cin, H, W = x_nchw.shape
    x_packed = jnp.transpose(x_nchw, (0, 2, 3, 1)).reshape(B, H, W * cin)
    out = mbconv_block_packed(x_packed, kp, cin=cin, cexp=cexp, cout=cout,
                              KH=KH, KW=KW, donate_input=True)
    return jnp.transpose(out.reshape(B, H, W, cout), (0, 3, 1, 2))


# --------------------------------------------------------------------------------------
# Raw parameters + pure-JAX reference (ground truth for validation)
# --------------------------------------------------------------------------------------
def make_params(key, cin=8, expand_ratio=4, ksize=3, se_ratio=0.25, cout=8, eps=1e-3):
    cexp = cin * expand_ratio
    csq = max(1, int(cin * se_ratio))
    ks = jax.random.split(key, 8)

    def bn(k, c):
        g = 1.0 + 0.05 * jax.random.normal(k, (c,), jnp.float32)
        b = 0.02 * jax.random.normal(jax.random.fold_in(k, 1), (c,), jnp.float32)
        m = 0.10 * jax.random.normal(jax.random.fold_in(k, 2), (c,), jnp.float32)
        v = 1.0 + 0.05 * jnp.abs(jax.random.normal(jax.random.fold_in(k, 3), (c,), jnp.float32))
        return (g, b, m, v, eps)

    return dict(
        w_exp=0.2 * jax.random.normal(ks[3], (cin, cexp), jnp.float32),
        bn0=bn(ks[0], cexp),
        w_dw=0.2 * jax.random.normal(ks[4], (ksize, ksize, cexp), jnp.float32),
        bn1=bn(ks[1], cexp),
        w_sr=0.2 * jax.random.normal(ks[5], (cexp, csq), jnp.float32),
        b_sr=0.01 * jnp.ones((csq,), jnp.float32),
        w_se=0.2 * jax.random.normal(ks[6], (csq, cexp), jnp.float32),
        b_se=0.01 * jnp.ones((cexp,), jnp.float32),
        w_proj=0.2 * jax.random.normal(ks[7], (cexp, cout), jnp.float32),
        bn2=bn(ks[2], cout),
    )


def _bn_eval(x, gamma, beta, mean, var, eps):
    inv = gamma / jnp.sqrt(var + eps)
    return (x - mean[None, :, None, None]) * inv[None, :, None, None] + beta[None, :, None, None]


def _swish(x):
    return x * jax.nn.sigmoid(x)


def mbconv_ref(x, raw):
    """Pure-JAX reference of the PyTorch MBConvBlock forward (eval mode, f32)."""
    hp = lax.Precision.HIGHEST
    h = jnp.einsum("bchw,ce->behw", x, raw["w_exp"], precision=hp)
    h = _swish(_bn_eval(h, *raw["bn0"]))
    wdw = jnp.transpose(raw["w_dw"], (2, 0, 1))[:, None, :, :]    # (Cexp, 1, KH, KW)
    h = lax.conv_general_dilated(h, wdw, window_strides=(1, 1), padding="SAME",
                                 feature_group_count=h.shape[1],
                                 dimension_numbers=("NCHW", "OIHW", "NCHW"),
                                 precision=hp)
    h = _swish(_bn_eval(h, *raw["bn1"]))
    pooled = jnp.mean(h, axis=(2, 3))                             # (B, Cexp)
    sq = _swish(pooled @ raw["w_sr"] + raw["b_sr"])               # (B, Csq)
    ex = sq @ raw["w_se"] + raw["b_se"]                           # (B, Cexp)
    h = h * jax.nn.sigmoid(ex)[:, :, None, None]
    h = jnp.einsum("behw,eo->bohw", h, raw["w_proj"], precision=hp)
    h = _bn_eval(h, *raw["bn2"])
    return h + x                                                  # id_skip (stride 1, Cin==Cout)


# --------------------------------------------------------------------------------------
# Demo / self-check
# --------------------------------------------------------------------------------------
if __name__ == "__main__":
    key = jax.random.PRNGKey(0)
    kx, kparam = jax.random.split(key)

    B, CIN, H, W = 2, 8, 16, 16
    EXPAND, KSIZE, SE_RATIO, COUT = 4, 3, 0.25, 8
    CEXP = CIN * EXPAND

    x = jax.random.normal(kx, (B, CIN, H, W), jnp.float32)        # NCHW, like the nn.Module
    raw = make_params(kparam, cin=CIN, expand_ratio=EXPAND, ksize=KSIZE,
                      se_ratio=SE_RATIO, cout=COUT)
    kparams = prepare_params(raw, H, W)

    y = mbconv_block(x, kparams, cexp=CEXP, cout=COUT, KH=KSIZE, KW=KSIZE)
    jax.block_until_ready(y)
    assert y.shape == (B, COUT, H, W) and y.dtype == jnp.float32

    # Validate against the f32 reference (bf16 MXU operands -> ~1e-2-scale rounding).
    y_ref = mbconv_ref(x, raw)
    assert jnp.allclose(y, y_ref, rtol=5e-2, atol=5e-2), float(jnp.max(jnp.abs(y - y_ref)))
    print("KERNEL_OK")
</pallas_src>

<mosaic_0001>
module attributes {stable_mosaic.version = 11 : i64} {
  func.func @k(%arg0: memref<8x128xf32, #tpu.memory_space<vmem>>, %arg1: memref<8x128xf32, #tpu.memory_space<vmem>>) attributes {dimension_semantics = [], scalar_prefetch = 0 : i64, scratch_operands = 0 : i64, tpu.core_type = #tpu.core_type<tc>} {
    %c0 = arith.constant 0 : index
    %c0_0 = arith.constant 0 : index
    %0 = vector.load %arg0[%c0, %c0_0] : memref<8x128xf32, #tpu.memory_space<vmem>>, vector<8x128xf32>
    %c1_i32 = arith.constant 1 : i32
    %1 = tpu.dynamic_rotate %0 by %c1_i32 dim 1 : vector<8x128xf32>, i32 -> vector<8x128xf32>
    %c0_1 = arith.constant 0 : index
    %c0_2 = arith.constant 0 : index
    %2 = vector.load %arg1[%c0_1, %c0_2] : memref<8x128xf32, #tpu.memory_space<vmem>>, vector<8x128xf32>
    tpu.vector_store %arg1[%c0_1, %c0_2], %1 {strides = array<i32>} : memref<8x128xf32, #tpu.memory_space<vmem>>, vector<8x128xf32>,
    return
  }
}

</mosaic_0001>

<llo_original>
// kernel: tpu_custom_call.1
$region0: #{tpu_custom_call.1}
  #allocation0 [shape = 'u32[]', space=smem, size = 0x4, offset = 0x4, fixed_abs, tag = 'smem constant byte address 0x4 - core index']
  #allocation1 [shape = 'u32[72,128]{1,0:T(1,128)}', space=vmem, size = 0x9000, scoped, tag = 'internal scratch']
  %s0 = inlined_call_operand.hbm [shape: f32[8,128], index: 0, kind: input, shape index: {}]
  %s1 = inlined_call_operand.hbm [shape: f32[8,128], index: 1, kind: output, shape index: {}]
  %s2 = sld [smem:[#allocation0]]
  $region18: #{tpu_custom_call.1} parent=0
    _
  %s4 = ssub.s32 1, %s2
  %s5 = scalar_select 0, %s4, %s2
  $region1: #{tpu_custom_call.1} parent=0
    #allocation2 [shape = 'u8[4096]{0}', space=vmem, size = 0x1000, scoped, tag = 'input window, operand 0, single buffered']
    #allocation3 [shape = 's32[1]{0}', space=sflag, size = 0x4, scoped, tag = 'scoped memory for tpu_custom_call.1']
    #allocation4 [shape = 's32[1]{0}', space=sflag, size = 0x4, scoped, tag = 'scoped memory for tpu_custom_call.1']
    #allocation5 [shape = 'u8[4096]{0}', space=vmem, size = 0x1000, scoped, tag = 'output window, operand 0, single buffered']
    %6 = vsyncpa [#allocation3], 0
    %7 = vsyncpa [#allocation4], 0
    // Predicated region
    $region2: #{tpu_custom_call.1} parent=1 // pred_check
      _
    $region3: #{tpu_custom_call.1} parent=1 // pred_check_branch
      %9 = sbr.rel (0) target = $region5
    $region4: #{tpu_custom_call.1} parent=1 // pred_region
      %11 = vsyncadd [#allocation3], 0
      %s13 = sshll.u32 %s0, 4
      %s14 = int_to_ptr.hbm [resolvable:$true] %s13
      %s15 = sshll.u32 [#allocation2], 4
      %s16 = int_to_ptr.vmem [resolvable:$true] %s15
      %18 = dma.hbm_to_vmem [thread:$0]  %s14, 128, %s16, [#allocation3]
    $region5: #{tpu_custom_call.1} parent=1 // pred_fallthru
      _
    // Predicated region
    $region6: #{tpu_custom_call.1} parent=1 // pred_check
      _
    $region7: #{tpu_custom_call.1} parent=1 // pred_check_branch
      %20 = sbr.rel (0) target = $region9
    $region8: #{tpu_custom_call.1} parent=1 // pred_region
      %22 = dma.done [#allocation3], 128
    $region9: #{tpu_custom_call.1} parent=1 // pred_fallthru
      _
    %v23 = vld [vmem:[#allocation2] sm:$0xff]
    %24 = vrot.lane.b32.xlu0 %v23, 1
    %v25 = vpop.permute.xlu0 %24
    %26 = vst [vmem:[#allocation5] sm:$0xff] %v25
    // Predicated region
    $region10: #{tpu_custom_call.1} parent=1 // pred_check
      _
    $region11: #{tpu_custom_call.1} parent=1 // pred_check_branch
      %28 = sbr.rel (0) target = $region13
    $region12: #{tpu_custom_call.1} parent=1 // pred_region
      %30 = vsyncadd [#allocation4], 0
      %s32 = sshll.u32 [#allocation5], 4
      %s33 = int_to_ptr.vmem [resolvable:$true] %s32
      %s34 = sshll.u32 %s1, 4
      %s35 = int_to_ptr.hbm [resolvable:$true] %s34
      %37 = dma.vmem_to_hbm [thread:$0]  %s33, 128, %s35, [#allocation4]
    $region13: #{tpu_custom_call.1} parent=1 // pred_fallthru
      _
    // Predicated region
    $region14: #{tpu_custom_call.1} parent=1 // pred_check
      _
    $region15: #{tpu_custom_call.1} parent=1 // pred_check_branch
      %39 = sbr.rel (0) target = $region17
    $region16: #{tpu_custom_call.1} parent=1 // pred_region
      %41 = dma.done [#allocation4], 128
    $region17: #{tpu_custom_call.1} parent=1 // pred_fallthru
      _
    %42 = vsyncpa [#allocation3], 1
    %43 = vsyncpa [#allocation4], 1

</llo_original>
